<compile_context>
chip_gen: v6e
topology: v6e:2x2x1
jax: 0.10.0
libtpu: 0.0.40
codegen_flags: <defaults>
</compile_context>

<pallas_src>
import jax
import jax.numpy as jnp
from jax import lax
from jax.experimental import pallas as pl
from jax.experimental.pallas import tpu as pltpu


def _make_lse_kernel(n_classes: int, tc: int):
    """Per-row streaming logsumexp over class chunks of width tc."""
    col_ragged = (n_classes % tc) != 0

    def kernel(logits_ref, lse_ref, m_scr, l_scr):
        # logits_ref: (TM, TC) native dtype      lse_ref: (TM, 1) f32 (out)
        # m_scr/l_scr: (TM, 1) f32 scratch, persistent across the class axis.
        j = pl.program_id(1)
        j_last = pl.num_programs(1) - 1

        @pl.when(j == 0)
        def _init():
            m_scr[...] = jnp.full_like(m_scr, -jnp.inf)
            l_scr[...] = jnp.zeros_like(l_scr)

        def update(x):
            # online (streaming) log-sum-exp update in f32
            m_old = m_scr[...]
            m_new = jnp.maximum(m_old, jnp.max(x, axis=-1, keepdims=True))
            l_scr[...] = (l_scr[...] * jnp.exp(m_old - m_new)
                          + jnp.sum(jnp.exp(x - m_new), axis=-1, keepdims=True))
            m_scr[...] = m_new

        if col_ragged:
            # Mask-free fast path for every chunk except the ragged last one.
            @pl.when(j != j_last)
            def _body_full():
                update(logits_ref[...].astype(jnp.float32))

            @pl.when(j == j_last)
            def _body_masked():
                x = logits_ref[...].astype(jnp.float32)
                lane = lax.broadcasted_iota(jnp.int32, x.shape, 1)
                # local lane iota vs. a scalar threshold (no j*tc + iota add)
                x = jnp.where(lane < (n_classes - j * tc), x, -jnp.inf)
                update(x)
        else:
            update(logits_ref[...].astype(jnp.float32))

        @pl.when(j == j_last)
        def _finalize():
            lse_ref[...] = m_scr[...] + jnp.log(l_scr[...])

    return kernel


def _vmem_capacity_bytes():
    try:
        return int(pltpu.get_tpu_info().vmem_capacity_bytes)
    except Exception:
        return 64 * 1024 * 1024  # conservative (v7x-sized) fallback


def _sublane_multiple(itemsize):
    # packed-sublane multiple: 8 for 4-byte, 16 for 2-byte, 32 for 1-byte dtypes
    return max(8, 32 // max(int(itemsize), 1))


def _choose_tiles(n, c, itemsize, vmem_cap, sub):
    # lane (class) tile: multiple of 128, grown toward full C; full C when C < 128
    if c <= 128:
        tc = c
    else:
        tc = min((c // 128) * 128, 8192)
    # row (sublane) tile: sized so the double-buffered logits block uses ~1/4 of
    # physical VMEM (16 MiB tiles on 128 MiB chips, 8 MiB on v7x's 64 MiB).
    budget = min(32 * 1024 * 1024, vmem_cap // 8)
    tm = (budget // (tc * itemsize)) // sub * sub
    tm = max(sub, min(tm, 1024))
    if n <= sub:
        tm = n                      # block dim == full array dim is allowed
    else:
        tm = min(tm, (n // sub) * sub)
        # keep at least 2 row blocks so both v7x TensorCores get work
        if n >= 2 * sub:
            tm = min(tm, max(sub, ((n // 2) // sub) * sub))
    return tm, tc


def _fit_tiles(tm, tc, itemsize, vmem_cap, sub):
    """Shrink (tm, tc) until the double-buffered logits block fits physical VMEM."""
    max_block_bytes = max(2 << 20, vmem_cap // 4 - (4 << 20))
    while tm * tc * itemsize > max_block_bytes and tm > sub:
        tm = max(sub, ((tm // 2) // sub) * sub)
    while tm * tc * itemsize > max_block_bytes and tc > 128:
        tc = max(128, ((tc // 2) // 128) * 128)
    return tm, tc


def weighted_cross_entropy_loss(outputs, labels, class_weights, *, tm=None, tc=None):
    """outputs: [N, C] float, labels: [N] int, class_weights: [C] float -> scalar f32."""
    n, c = outputs.shape
    itemsize = jnp.dtype(outputs.dtype).itemsize
    sub = _sublane_multiple(itemsize)
    vmem_cap = _vmem_capacity_bytes()

    auto_tm, auto_tc = _choose_tiles(n, c, itemsize, vmem_cap, sub)
    tm = auto_tm if tm is None else tm
    tc = auto_tc if tc is None else tc
    # user-supplied tm must respect the packed-sublane multiple of the dtype
    if tm != n:
        tm = max(sub, (tm // sub) * sub)
    tm, tc = _fit_tiles(tm, tc, itemsize, vmem_cap, sub)

    labels = labels.astype(jnp.int32)
    # O(N) finishing math hoisted to the wrapper (cheap XLA gathers/reductions):
    w_y = class_weights.astype(jnp.float32)[labels]                         # (N,)
    picked = jnp.take_along_axis(outputs, labels[:, None], axis=-1)[:, 0]   # (N,)
    picked = picked.astype(jnp.float32)

    grid = (pl.cdiv(n, tm), pl.cdiv(c, tc))
    n_pad = grid[0] * tm

    tile_bytes = tm * tc * itemsize
    vmem_limit = int(min(vmem_cap - (8 << 20),
                         max(32 << 20, 2 * tile_bytes + (4 << 20))))

    lse_rows = pl.pallas_call(
        _make_lse_kernel(c, tc),
        out_shape=jax.ShapeDtypeStruct((n_pad, 1), jnp.float32),
        grid_spec=pltpu.PrefetchScalarGridSpec(
            num_scalar_prefetch=0,
            grid=grid,
            in_specs=[pl.BlockSpec((tm, tc), lambda i, j: (i, j))],   # native dtype
            out_specs=pl.BlockSpec((tm, 1), lambda i, j: (i, 0)),
            scratch_shapes=[pltpu.VMEM((tm, 1), jnp.float32)] * 2,    # m, l
        ),
        compiler_params=pltpu.CompilerParams(
            dimension_semantics=("parallel", "arbitrary"),
            vmem_limit_bytes=vmem_limit,
        ),
    )(outputs)

    # Padded rows of a ragged last row-block read OOB garbage; every op is
    # row-independent, so slicing here discards them safely.
    lse = lse_rows[:n, 0]
    num = jnp.sum(w_y * (lse - picked))
    den = jnp.sum(w_y)
    # TODO(synk): no ignore_index / zero-total-weight guard, matching plain
    # nn.CrossEntropyLoss(weight=w) semantics (sum(w[y]) == 0 -> NaN, as in torch).
    return num / den


def _reference(outputs, labels, class_weights):
    # pure-JAX reference matching torch.nn.CrossEntropyLoss(weight=w), mean reduction
    logp = jax.nn.log_softmax(outputs.astype(jnp.float32), axis=-1)
    picked = jnp.take_along_axis(logp, labels[:, None].astype(jnp.int32), axis=-1)[:, 0]
    w = class_weights.astype(jnp.float32)[labels]
    return jnp.sum(-w * picked) / jnp.sum(w)


if __name__ == "__main__":
    key = jax.random.PRNGKey(0)
    k1, k2 = jax.random.split(key)

    # 1) small classification head, f32; forced small tiles -> 2x2 grid exercises
    #    the streaming online-LSE path and the parallel row axis.
    N, C = 16, 256
    outputs = jax.random.normal(k1, (N, C), dtype=jnp.float32)
    labels = jax.random.randint(k2, (N,), 0, C, dtype=jnp.int32)
    class_weights = 0.5 + 0.01 * jnp.arange(C, dtype=jnp.float32)
    loss = jax.block_until_ready(
        weighted_cross_entropy_loss(outputs, labels, class_weights, tm=8, tc=128))
    ref = _reference(outputs, labels, class_weights)
    assert jnp.allclose(loss, ref, rtol=1e-5, atol=1e-5), (loss, ref)

    # 2) ragged N and C + native-bf16 streaming; tm is a multiple of the bf16
    #    packed-sublane (16); exercises last-chunk column masking and row padding.
    N2, C2 = 21, 200
    out2 = jax.random.normal(k1, (N2, C2), dtype=jnp.bfloat16)
    lab2 = jax.random.randint(k2, (N2,), 0, C2, dtype=jnp.int32)
    cw2 = 0.25 + 0.05 * jnp.arange(C2, dtype=jnp.float32)
    loss2 = jax.block_until_ready(
        weighted_cross_entropy_loss(out2, lab2, cw2, tm=16, tc=128))
    ref2 = _reference(out2, lab2, cw2)
    assert jnp.allclose(loss2, ref2, rtol=1e-4, atol=1e-4), (loss2, ref2)

    # 3) auto tile selection (generation-aware sizing, grid[0] >= 2, ragged C).
    N3, C3 = 64, 1000
    out3 = jax.random.normal(k1, (N3, C3), dtype=jnp.float32)
    lab3 = jax.random.randint(k2, (N3,), 0, C3, dtype=jnp.int32)
    cw3 = jnp.ones((C3,), dtype=jnp.float32)
    loss3 = jax.block_until_ready(weighted_cross_entropy_loss(out3, lab3, cw3))
    ref3 = _reference(out3, lab3, cw3)
    assert jnp.allclose(loss3, ref3, rtol=1e-5, atol=1e-5), (loss3, ref3)

    print("KERNEL_OK")
</pallas_src>

<mosaic_0001>
module attributes {stable_mosaic.version = 11 : i64} {
  func.func @kernel(%arg0: i32, %arg1: i32, %arg2: memref<8x128xf32, #tpu.memory_space<vmem>>, %arg3: memref<8x1xf32, #tpu.memory_space<vmem>>, %arg4: memref<8x1xf32, #tpu.memory_space<vmem>>, %arg5: memref<8x1xf32, #tpu.memory_space<vmem>>) attributes {dimension_semantics = [#tpu.dimension_semantics<parallel>, #tpu.dimension_semantics<arbitrary>], iteration_bounds = array<i64: 2, 2>, scalar_prefetch = 0 : i64, scratch_operands = 2 : i64, tpu.core_type = #tpu.core_type<tc>, window_params = [{transform_indices = @transform_0, window_bounds = array<i64: 8, 128>}, {transform_indices = @transform_1, window_bounds = array<i64: 8, 1>}]} {
    %c0_i32 = arith.constant 0 : i32
    %0 = arith.cmpi eq, %arg1, %c0_i32 : i32
    %1 = arith.extui %0 : i1 to i32
    %c0_i32_0 = arith.constant 0 : i32
    %2 = arith.cmpi ne, %1, %c0_i32_0 : i32
    scf.if %2 {
      %cst_12 = arith.constant 0xFF800000 : f32
      %23 = vector.broadcast %cst_12 : f32 to vector<8x1xf32>
      %c0_13 = arith.constant 0 : index
      %c0_14 = arith.constant 0 : index
      %24 = vector.load %arg4[%c0_13, %c0_14] : memref<8x1xf32, #tpu.memory_space<vmem>>, vector<8x1xf32>
      tpu.vector_store %arg4[%c0_13, %c0_14], %23 {strides = array<i32>} : memref<8x1xf32, #tpu.memory_space<vmem>>, vector<8x1xf32>,
      %cst_15 = arith.constant 0.000000e+00 : f32
      %25 = vector.broadcast %cst_15 : f32 to vector<8x1xf32>
      %c0_16 = arith.constant 0 : index
      %c0_17 = arith.constant 0 : index
      %26 = vector.load %arg5[%c0_16, %c0_17] : memref<8x1xf32, #tpu.memory_space<vmem>>, vector<8x1xf32>
      tpu.vector_store %arg5[%c0_16, %c0_17], %25 {strides = array<i32>} : memref<8x1xf32, #tpu.memory_space<vmem>>, vector<8x1xf32>,
    } else {
    }
    %c0 = arith.constant 0 : index
    %c0_1 = arith.constant 0 : index
    %3 = vector.load %arg2[%c0, %c0_1] : memref<8x128xf32, #tpu.memory_space<vmem>>, vector<8x128xf32>
    %c0_2 = arith.constant 0 : index
    %c0_3 = arith.constant 0 : index
    %4 = vector.load %arg4[%c0_2, %c0_3] : memref<8x1xf32, #tpu.memory_space<vmem>>, vector<8x1xf32>
    %cst = arith.constant dense<0xFF800000> : vector<8xf32>
    %5 = vector.multi_reduction <maximumf>, %3, %cst [1] : vector<8x128xf32> to vector<8xf32>
    %6 = vector.shape_cast %5 : vector<8xf32> to vector<8x1xf32>
    %7 = arith.maximumf %4, %6 : vector<8x1xf32>
    %c0_4 = arith.constant 0 : index
    %c0_5 = arith.constant 0 : index
    %8 = vector.load %arg5[%c0_4, %c0_5] : memref<8x1xf32, #tpu.memory_space<vmem>>, vector<8x1xf32>
    %9 = arith.subf %4, %7 : vector<8x1xf32>
    %10 = math.exp %9 : vector<8x1xf32>
    %11 = arith.mulf %8, %10 : vector<8x1xf32>
    %12 = vector.broadcast %7 : vector<8x1xf32> to vector<8x128xf32>
    %13 = arith.subf %3, %12 : vector<8x128xf32>
    %14 = math.exp %13 : vector<8x128xf32>
    %cst_6 = arith.constant dense<0.000000e+00> : vector<8xf32>
    %15 = vector.multi_reduction <add>, %14, %cst_6 [1] : vector<8x128xf32> to vector<8xf32>
    %16 = vector.shape_cast %15 : vector<8xf32> to vector<8x1xf32>
    %17 = arith.addf %11, %16 : vector<8x1xf32>
    %c0_7 = arith.constant 0 : index
    %c0_8 = arith.constant 0 : index
    %18 = vector.load %arg5[%c0_7, %c0_8] : memref<8x1xf32, #tpu.memory_space<vmem>>, vector<8x1xf32>
    tpu.vector_store %arg5[%c0_7, %c0_8], %17 {strides = array<i32>} : memref<8x1xf32, #tpu.memory_space<vmem>>, vector<8x1xf32>,
    %c0_9 = arith.constant 0 : index
    %c0_10 = arith.constant 0 : index
    %19 = vector.load %arg4[%c0_9, %c0_10] : memref<8x1xf32, #tpu.memory_space<vmem>>, vector<8x1xf32>
    tpu.vector_store %arg4[%c0_9, %c0_10], %7 {strides = array<i32>} : memref<8x1xf32, #tpu.memory_space<vmem>>, vector<8x1xf32>,
    %c1_i32 = arith.constant 1 : i32
    %20 = arith.cmpi eq, %arg1, %c1_i32 : i32
    %21 = arith.extui %20 : i1 to i32
    %c0_i32_11 = arith.constant 0 : i32
    %22 = arith.cmpi ne, %21, %c0_i32_11 : i32
    scf.if %22 {
      %c0_12 = arith.constant 0 : index
      %c0_13 = arith.constant 0 : index
      %23 = vector.load %arg4[%c0_12, %c0_13] : memref<8x1xf32, #tpu.memory_space<vmem>>, vector<8x1xf32>
      %c0_14 = arith.constant 0 : index
      %c0_15 = arith.constant 0 : index
      %24 = vector.load %arg5[%c0_14, %c0_15] : memref<8x1xf32, #tpu.memory_space<vmem>>, vector<8x1xf32>
      %25 = math.log %24 : vector<8x1xf32>
      %26 = arith.addf %23, %25 : vector<8x1xf32>
      %c0_16 = arith.constant 0 : index
      %c0_17 = arith.constant 0 : index
      %27 = vector.load %arg3[%c0_16, %c0_17] : memref<8x1xf32, #tpu.memory_space<vmem>>, vector<8x1xf32>
      tpu.vector_store %arg3[%c0_16, %c0_17], %26 {strides = array<i32>} : memref<8x1xf32, #tpu.memory_space<vmem>>, vector<8x1xf32>,
    } else {
    }
    return
  }
  func.func @transform_0(%arg0: i32, %arg1: i32) -> (i32, i32) {
    %c0_i32 = arith.constant 0 : i32
    return %arg0, %arg1 : i32, i32
  }
  func.func @transform_1(%arg0: i32, %arg1: i32) -> (i32, i32) {
    %c0_i32 = arith.constant 0 : i32
    %c0_i32_0 = arith.constant 0 : i32
    return %arg0, %c0_i32 : i32, i32
  }
}

</mosaic_0001>

<llo_original>
// kernel: tpu_custom_call.1
$region0: #{tpu_custom_call.1}
  #allocation0 [shape = 'u32[]', space=smem, size = 0x4, offset = 0x4, fixed_abs, tag = 'smem constant byte address 0x4 - core index']
  #allocation1 [shape = 'u32[144,128]{1,0:T(1,128)}', space=vmem, size = 0x12000, scoped, tag = 'internal scratch']
  #allocation2 [shape = 'f32[8,1]{1,0:T(8,128)}', space=vmem, size = 0x1000, scoped, tag = 'scratch operand']
  #allocation3 [shape = 'f32[8,1]{1,0:T(8,128)}', space=vmem, size = 0x1000, scoped, tag = 'scratch operand']
  %s0 = inlined_call_operand.hbm [shape: f32[16,256], index: 0, kind: input, shape index: {}]
  %s1 = inlined_call_operand.vmem [shape: f32[16,1], index: 1, kind: output, shape index: {}]
  %s2 = sld [smem:[#allocation0]]
  $region49: #{tpu_custom_call.1} parent=0
    _
  %s4 = ssub.s32 1, %s2
  %s5 = scalar_select 0, %s4, %s2
  $region1: #{tpu_custom_call.1} parent=0
    #allocation4 [shape = 'u8[8192]{0}', space=vmem, size = 0x2000, scoped, tag = 'input window, operand 0']
    #allocation5 [shape = 's32[2]{0}', space=sflag, size = 0x8, scoped, tag = 'scoped memory for tpu_custom_call.1']
    %6 = vsyncpa [#allocation5], 0
    %s7 = scalar_lea.sflag [#allocation5], 1
    %8 = vsyncpa %s7, 0
    loop: start=0, step=1, limit=6
    $region2: #{tpu_custom_call.1} parent=1 // loop_pre_header
      _
    $region3: #{tpu_custom_call.1} parent=1 // loop_header
      %s10 = sphi 0, %s14
      %p11 = scmp.ge.s32.totalorder %s10, 6
      %s17 = sphi 0, %s29
      %s18 = sphi 0, %s25
      %s19 = sphi 0, %s17
      %s20 = sphi 0, %s18
      %s21 = sphi 0, %s19
      %s22 = sphi 0, %s20
      %s34 = sphi 0, %s36
      %s37 = sphi 0, %s34
      %s38 = sphi 0, %s37
      %s54 = sphi 0, %s38
      %s60 = sphi 0, %s62
      %s63 = sphi 0, %s60
      %s64 = sphi 0, %s63
      %s80 = sphi 0, %s64
    $region4: #{tpu_custom_call.1} parent=1 // loop_header_branch
      %13 = sbr.rel (%p11) target = $region8
    $region5: #{tpu_custom_call.1} parent=1 // loop_body
      %s15 = ssub.s32 %s10, 1
      %s16 = ssub.s32 %s10, 2
      %s23 = sadd.s32 1, %s18
      %p24 = scmp.ge.s32.totalorder %s23, 2
      %s25 = scalar_select %p24, 0, %s23
      %s26 = sadd.s32 1, %s17
      %s27 = scalar_select %p24, %s26, %s17
      %p28 = scmp.ge.s32.totalorder %s27, 2
      %s29 = scalar_select %p28, 0, %s27
      %s30 = ssub.s32 %s17, %s29
      %s31 = ssub.s32 %s18, %s25
      %s32 = sor.u32 %s30, %s31
      %p33 = scmp.eq.s32.totalorder %s32, 0
      %s35 = sadd.s32 %s34, 1
      %s36 = scalar_select %p33, %s34, %s35
      %p39 = pneg %p33
      %p40 = scmp.eq.s32.totalorder %s10, 3
      %p41 = por %p39, %p40
      %p42 = scmp.ne.s32.totalorder %s34, %s37
      %p43 = scmp.eq.s32.totalorder %s10, 0
      %p44 = por %p42, %p43
      %p45 = scmp.ne.s32.totalorder %s34, %s37
      %p46 = scmp.eq.s32.totalorder %s15, 3
      %p47 = por %p45, %p46
      %p48 = scmp.ne.s32.totalorder %s37, %s38
      %p49 = scmp.eq.s32.totalorder %s15, 0
      %p50 = por %p48, %p49
      %p51 = scmp.ne.s32.totalorder %s37, %s38
      %p52 = scmp.eq.s32.totalorder %s16, 3
      %p53 = por %p51, %p52
      %p55 = scmp.ne.s32.totalorder %s38, %s54
      %p56 = scmp.eq.s32.totalorder %s16, 0
      %p57 = por %p55, %p56
      %s58 = ssub.s32 %s17, %s29
      %p59 = scmp.eq.s32.totalorder %s58, 0
      %s61 = sadd.s32 %s60, 1
      %s62 = scalar_select %p59, %s60, %s61
      %p65 = pneg %p59
      %p66 = scmp.eq.s32.totalorder %s10, 3
      %p67 = por %p65, %p66
      %p68 = scmp.ne.s32.totalorder %s60, %s63
      %p69 = scmp.eq.s32.totalorder %s10, 0
      %p70 = por %p68, %p69
      %p71 = scmp.ne.s32.totalorder %s60, %s63
      %p72 = scmp.eq.s32.totalorder %s15, 3
      %p73 = por %p71, %p72
      %p74 = scmp.ne.s32.totalorder %s63, %s64
      %p75 = scmp.eq.s32.totalorder %s15, 0
      %p76 = por %p74, %p75
      %p77 = scmp.ne.s32.totalorder %s63, %s64
      %p78 = scmp.eq.s32.totalorder %s16, 3
      %p79 = por %p77, %p78
      %p81 = scmp.ne.s32.totalorder %s64, %s80
      %p82 = scmp.eq.s32.totalorder %s16, 0
      %p83 = por %p81, %p82
      %p84 = scmp.le.s32.totalorder 1, %s10
      %p85 = scmp.lt.s32.totalorder %s10, 5
      %p86 = pnand %p84, %p85
      %p87 = pneg %p86
      // Predicated region
      $region9: #{tpu_custom_call.1} parent=5 // pred_check
        _
      $region10: #{tpu_custom_call.1} parent=5 // pred_check_branch
        %89 = sbr.rel (%p86) target = $region12
      $region11: #{tpu_custom_call.1} parent=5 // pred_region
        %s90 = ssub.s32 %s10, 1
      $region12: #{tpu_custom_call.1} parent=5 // pred_fallthru
        _
      %p91 = scmp.lt.s32.totalorder %s10, 4
      // Predicated region
      $region13: #{tpu_custom_call.1} parent=5 // pred_check
        %p92 = pneg %p91
      $region14: #{tpu_custom_call.1} parent=5 // pred_check_branch
        %94 = sbr.rel (%p92) target = $region16
      $region15: #{tpu_custom_call.1} parent=5 // pred_region
        // Predicated region
        $region17: #{tpu_custom_call.1} parent=15 // pred_check
          %p95 = pneg %p44
        $region18: #{tpu_custom_call.1} parent=15 // pred_check_branch
          %97 = sbr.rel (%p95) target = $region20
        $region19: #{tpu_custom_call.1} parent=15 // pred_region
          %s98 = sand.u32 %s34, 1
          %s99 = scalar_lea.sflag [#allocation5], %s98
          %s100 = sand.u32 %s34, 1
          %s101 = smul.addr %s100, 8
          %s102 = scalar_lea.vmem [#allocation4], %s101
          %s104 = ssub.s32 128, 128
          %105 = vsyncadd %s99, %s104
          %s106 = smul.addr %s17, 2
          %s107 = sadd.s32 %s18, %s106
          %s108 = smul.addr %s107, 128
          %s109 = scalar_lea.hbm %s0, %s108
          %s111 = sshll.u32 %s102, 4
          %s112 = int_to_ptr.vmem [resolvable:$true] %s111
          %114 = dma.hbm_to_vmem [thread:$0]  %s109, 128, %s112, %s99
        $region20: #{tpu_custom_call.1} parent=15 // pred_fallthru
          _
      $region16: #{tpu_custom_call.1} parent=5 // pred_fallthru
        _
      %p115 = scmp.le.s32.totalorder 1, %s10
      %p116 = scmp.lt.s32.totalorder %s10, 5
      %p117 = pnand %p115, %p116
      %p118 = pneg %p117
      // Predicated region
      $region21: #{tpu_custom_call.1} parent=5 // pred_check
        _
      $region22: #{tpu_custom_call.1} parent=5 // pred_check_branch
        %120 = sbr.rel (%p117) target = $region24
      $region23: #{tpu_custom_call.1} parent=5 // pred_region
        %s121 = ssub.s32 %s10, 1
        %s122 = sand.u32 %s37, 1
        %s123 = scalar_lea.sflag [#allocation5], %s122
        %s124 = sand.u32 %s37, 1
        %s125 = smul.addr %s124, 8
        %s126 = scalar_lea.vmem [#allocation4], %s125
        // Predicated region
        $region25: #{tpu_custom_call.1} parent=23 // pred_check
          %p127 = pneg %p50
        $region26: #{tpu_custom_call.1} parent=23 // pred_check_branch
          %129 = sbr.rel (%p127) target = $region28
        $region27: #{tpu_custom_call.1} parent=23 // pred_region
          %130 = dma.done %s123, 128
        $region28: #{tpu_custom_call.1} parent=23 // pred_fallthru
          _
        %s131 = sand.u32 %s37, 1
        %s132 = scalar_lea.sflag [#allocation5], %s131
        %s133 = sand.u32 %s37, 1
        %s134 = smul.addr %s133, 8
        %s135 = scalar_lea.vmem [#allocation4], %s134
        %p136 = pneg %p50
        %p137 = pneg %p47
        %p138 = pneg %p76
        %p139 = pneg %p73
        %p140 = scmp.lt.s32.totalorder %s19, 1
        %s141 = scalar_select %p140, %s19, 1
        %s142 = smul.addr %s141, 8
        %s143 = scalar_lea.vmem %s1, %s142
        %p144 = scmp.lt.s32.totalorder %s19, 1
        %s145 = scalar_select %p144, %s19, 1
        %s146 = smul.addr %s145, 8
        %s147 = scalar_lea.vmem %s1, %s146
        %p148 = scmp.eq.s32.totalorder %s20, 0
        // Predicated region
        $region29: #{tpu_custom_call.1} parent=23 // pred_check
          %p149 = pneg %p148
        $region30: #{tpu_custom_call.1} parent=23 // pred_check_branch
          %151 = sbr.rel (%p149) target = $region32
        $region31: #{tpu_custom_call.1} parent=23 // pred_region
          %vm152 = vcmask 7168
          %153 = vst.msk [vmem:[#allocation2] sm:$0xff] %vm152, -inf
          %154 = vst.msk [vmem:[#allocation3] sm:$0xff] %vm152, 0.0
        $region32: #{tpu_custom_call.1} parent=23 // pred_fallthru
          _
        %v155 = vld [vmem:[%s126] sm:$0xff]
        %v156 = vld [vmem:[#allocation2] sm:$0xff]
        %157 = vmax.xlane.f32.xlu0 %v155
        %v158 = vpop.xlane.xlu0 %157
        %v159 = vmax.f32 %v156, %v158
        %v160 = vld [vmem:[#allocation3] sm:$0xff]
        %v161 = vsub.f32 %v156, %v159
        %v162 = vmul.f32 %v161, 1.442695
        %v163 = vpow.pop %v162
        %v164 = vmul.f32 %v160, %v163
        %166 = vset.pattern.permute.xlu0 0
        %167 = vperm.xlu0 %166, %v159
        %v168 = vpop.permute.xlu0 %167
        %v170 = vsub.f32 %v155, %v168
        %v171 = vmul.f32 %v170, 1.442695
        %v172 = vpow.pop %v171
        %173 = vadd.xlane.f32.xlu0 %v172
        %v174 = vpop.xlane.xlu0 %173
        %v175 = vadd.f32 %v164, %v174
        %vm176 = vcmask 7168
        %177 = vst.msk [vmem:[#allocation3] sm:$0xff] %vm176, %v175
        %178 = vst.msk [vmem:[#allocation2] sm:$0xff] %vm176, %v159
        %p179 = scmp.eq.s32.totalorder %s20, 1
        // Predicated region
        $region33: #{tpu_custom_call.1} parent=23 // pred_check
          %p180 = pneg %p179
        $region34: #{tpu_custom_call.1} parent=23 // pred_check_branch
          %182 = sbr.rel (%p180) target = $region36
        $region35: #{tpu_custom_call.1} parent=23 // pred_region
          %v183 = vld [vmem:[#allocation2] sm:$0xff]
          %v184 = vld [vmem:[#allocation3] sm:$0xff]
          %v185 = vlog2.pop %v184
          %v186 = vmul.f32 %v185, 0.6931472
          %v187 = vadd.f32 %v183, %v186
          %188 = vst.msk [vmem:[%s147] sm:$0xff] %vm176, %v187
        $region36: #{tpu_custom_call.1} parent=23 // pred_fallthru
          _
        %p189 = scmp.lt.s32.totalorder %s19, 1
        %s190 = scalar_select %p189, %s19, 1
        %s191 = smul.addr %s190, 8
        %s192 = scalar_lea.vmem %s1, %s191
        // Predicated region
        $region37: #{tpu_custom_call.1} parent=23 // pred_check
          %p193 = pneg %p73
        $region38: #{tpu_custom_call.1} parent=23 // pred_check_branch
          %195 = sbr.rel (%p193) target = $region40
        $region39: #{tpu_custom_call.1} parent=23 // pred_region
          _
        $region40: #{tpu_custom_call.1} parent=23 // pred_fallthru
          _
      $region24: #{tpu_custom_call.1} parent=5 // pred_fallthru
        _
      %p196 = scmp.le.s32.totalorder 2, %s10
      // Predicated region
      $region41: #{tpu_custom_call.1} parent=5 // pred_check
        %p197 = pneg %p196
      $region42: #{tpu_custom_call.1} parent=5 // pred_check_branch
        %199 = sbr.rel (%p197) target = $region44
      $region43: #{tpu_custom_call.1} parent=5 // pred_region
        %s200 = ssub.s32 %s10, 2
        // Predicated region
        $region45: #{tpu_custom_call.1} parent=43 // pred_check
          %p201 = pneg %p79
        $region46: #{tpu_custom_call.1} parent=43 // pred_check_branch
          %203 = sbr.rel (%p201) target = $region48
        $region47: #{tpu_custom_call.1} parent=43 // pred_region
          %p204 = scmp.lt.s32.totalorder %s21, 1
          %s205 = scalar_select %p204, %s21, 1
          %s206 = smul.addr %s205, 8
          %s207 = scalar_lea.vmem %s1, %s206
        $region48: #{tpu_custom_call.1} parent=43 // pred_fallthru
          _
      $region44: #{tpu_custom_call.1} parent=5 // pred_fallthru
        _
    $region6: #{tpu_custom_call.1} parent=1 // loop_footer
      %s14 = sadd.s32 1, %s10
    $region7: #{tpu_custom_call.1} parent=1 // loop_footer_branch
      %9 = sbr.rel target = $region3
    $region8: #{tpu_custom_call.1} parent=1 // loop_exit
      _
    %208 = vsyncpa [#allocation5], 1
    %s209 = scalar_lea.sflag [#allocation5], 1
    %210 = vsyncpa %s209, 1

</llo_original>
